<compile_context>
chip_gen: v6e
topology: v6e:2x2x1
jax: 0.10.0
libtpu: 0.0.40
codegen_flags: <defaults>
</compile_context>

<pallas_src>
import jax
import jax.numpy as jnp
from jax.experimental import pallas as pl
from jax.experimental.pallas import tpu as pltpu


def _round_up(x, m):
    return ((x + m - 1) // m) * m


def _make_kernel(embed_dim):
    E = embed_dim

    def kernel(xv_ref, xa_ref, xt_ref, xu_ref,
               w1_ref, b1_ref, w2_ref, b2_ref, o_ref, x_scr):
        # xv/xa/xt/xu : (tb, E) f32      w1_ref : (4E, H) bf16
        # b1_ref      : (1, H)  f32      w2_ref : (1, H)  f32
        # b2_ref      : (1, 1)  f32 SMEM o_ref  : (tb, 1) f32
        # x_scr       : (tb, 4E) bf16 VMEM scratch (the fused torch.cat)
        #
        # Stage + cast (f32 -> bf16) the four feature tiles into one
        # lane-dense slab; the column slices are static multiples of E.
        x_scr[:, 0 * E:1 * E] = xv_ref[...].astype(x_scr.dtype)
        x_scr[:, 1 * E:2 * E] = xa_ref[...].astype(x_scr.dtype)
        x_scr[:, 2 * E:3 * E] = xt_ref[...].astype(x_scr.dtype)
        x_scr[:, 3 * E:4 * E] = xu_ref[...].astype(x_scr.dtype)

        # fc1: a single (tb, 4E) x (4E, H) MXU GEMM with f32 accumulation.
        acc = jnp.dot(x_scr[...], w1_ref[...],
                      preferred_element_type=jnp.float32)
        h = jnp.maximum(acc + b1_ref[...], 0.0)            # bias + ReLU (VPU, f32)

        # fc2 (H -> 1): VPU multiply + lane reduce (XLU); b2 scalar from SMEM.
        y = jnp.sum(h * w2_ref[...], axis=-1, keepdims=True) + b2_ref[0, 0]
        o_ref[...] = jax.nn.sigmoid(y).astype(o_ref.dtype)  # Sigmoid (EUP)

    return kernel


def _default_batch_tile(B, E, H):
    """Largest tile that (a) keeps >=4 grid steps when B allows and (b) stays
    within a conservative ~24 MiB VMEM budget."""
    # Per-batch-row VMEM: double-buffered f32 feature tiles, bf16 concat
    # scratch, double-buffered f32 output row.
    per_row = 2 * (4 * E * 4) + (4 * E * 2) + 2 * 4
    # Resident operands (W1 bf16, b1/w2 f32), x2 for pipeline buffers.
    fixed = 2 * (4 * E * H * 2 + 2 * H * 4) + 1024
    budget = 24 * 1024 * 1024
    cap = max(16, ((budget - fixed) // per_row) // 16 * 16)
    cap = min(cap, 4096)
    # >=4 grid steps when possible: >=2 steps per v7x TensorCore so the
    # activation DMA actually double-buffers.
    tile = max(16, _round_up(pl.cdiv(B, 4), 16))
    return int(min(cap, tile))


def fusion_predictor(video_feat, audio_feat, text_feat, user_feat, params,
                     *, batch_tile=None, compute_dtype=jnp.bfloat16):
    """Fused concat -> fc1 -> relu -> fc2 -> sigmoid forward pass."""
    w1, b1, w2, b2 = params
    B, E = video_feat.shape
    Din = 4 * E
    H = w1.shape[1]
    assert w1.shape == (Din, H), (w1.shape, Din, H)

    # ---- tiling ------------------------------------------------------------
    if batch_tile is None:
        tb = _default_batch_tile(B, E, H)
    else:
        tb = max(16, _round_up(batch_tile, 16))
    grid = (pl.cdiv(B, tb),)          # partial tail block handled by masking

    # ---- operand prep (features stay f32; cast happens inside the kernel) --
    xv = video_feat.astype(jnp.float32)
    xa = audio_feat.astype(jnp.float32)
    xt = text_feat.astype(jnp.float32)
    xu = user_feat.astype(jnp.float32)
    w1_c = w1.astype(compute_dtype)                 # bf16 MXU operand (resident)
    b1_r = b1.reshape(1, H).astype(jnp.float32)
    w2_r = w2.reshape(1, H).astype(jnp.float32)     # row vector for VPU reduce
    b2_s = b2.reshape(1, 1).astype(jnp.float32)     # scalar -> SMEM

    cost = pl.CostEstimate(
        flops=2 * B * Din * H + 3 * B * H,
        transcendentals=2 * B,                       # sigmoid ~ exp + recip
        bytes_accessed=(B * Din * 4                  # f32 activations in
                        + Din * H * 2                # W1 (bf16)
                        + (2 * H + 1) * 4            # b1, w2, b2
                        + B * 4),                    # output
    )

    kernel = _make_kernel(E)

    out = pl.pallas_call(
        kernel,
        out_shape=jax.ShapeDtypeStruct((B, 1), jnp.float32),
        grid_spec=pltpu.PrefetchScalarGridSpec(
            num_scalar_prefetch=0,
            grid=grid,
            in_specs=[
                pl.BlockSpec((tb, E), lambda i: (i, 0)),    # video tile (f32)
                pl.BlockSpec((tb, E), lambda i: (i, 0)),    # audio tile (f32)
                pl.BlockSpec((tb, E), lambda i: (i, 0)),    # text tile  (f32)
                pl.BlockSpec((tb, E), lambda i: (i, 0)),    # user tile  (f32)
                pl.BlockSpec((Din, H), lambda i: (0, 0)),   # W1 (resident)
                pl.BlockSpec((1, H), lambda i: (0, 0)),     # b1
                pl.BlockSpec((1, H), lambda i: (0, 0)),     # w2 row
                pl.BlockSpec(memory_space=pltpu.MemorySpace.SMEM),  # b2 scalar
            ],
            out_specs=pl.BlockSpec((tb, 1), lambda i: (i, 0)),
            scratch_shapes=[pltpu.VMEM((tb, Din), compute_dtype)],
        ),
        compiler_params=pltpu.CompilerParams(
            dimension_semantics=("parallel",)),
        cost_estimate=cost,
    )(xv, xa, xt, xu, w1_c, b1_r, w2_r, b2_s)

    return out


def init_params(embed_dim, hidden=512, dtype=jnp.float32, seed=0):
    """Deterministic parameter init (PyTorch-Linear-style uniform bounds)."""
    k = jax.random.PRNGKey(seed)
    k1, k2, k3, k4 = jax.random.split(k, 4)
    din = embed_dim * 4
    bound1 = 1.0 / (din ** 0.5)
    bound2 = 1.0 / (hidden ** 0.5)
    w1 = jax.random.uniform(k1, (din, hidden), dtype, -bound1, bound1)
    b1 = jax.random.uniform(k2, (hidden,), dtype, -bound1, bound1)
    w2 = jax.random.uniform(k3, (hidden, 1), dtype, -bound2, bound2)
    b2 = jax.random.uniform(k4, (1,), dtype, -bound2, bound2)
    return w1, b1, w2, b2


def reference(video, audio, text, user, params, compute_dtype=jnp.bfloat16):
    """Pure-JAX reference mirroring the kernel's bf16-in / f32-accumulate math."""
    w1, b1, w2, b2 = params
    x = jnp.concatenate([video, audio, text, user], axis=-1).astype(compute_dtype)
    h = jnp.dot(x, w1.astype(compute_dtype),
                preferred_element_type=jnp.float32) + b1
    h = jnp.maximum(h, 0.0)
    return jax.nn.sigmoid(h @ w2 + b2)


if __name__ == "__main__":
    E = 128         # embed_dim (small, consistent with the module's structure)
    H = 512         # fc1 output width (fixed by the module)
    params = init_params(E, H)

    key = jax.random.PRNGKey(0)

    # Case 1: tiny batch -> single (partial) grid step, default tile heuristic.
    B = 8
    kv, ka, kt, ku = jax.random.split(key, 4)
    video = jax.random.normal(kv, (B, E), jnp.float32)
    audio = jax.random.normal(ka, (B, E), jnp.float32)
    text = jax.random.normal(kt, (B, E), jnp.float32)
    user = jax.random.normal(ku, (B, E), jnp.float32)

    out = jax.block_until_ready(fusion_predictor(video, audio, text, user, params))
    ref = reference(video, audio, text, user, params)
    assert out.shape == (B, 1), out.shape
    assert jnp.allclose(out, ref, atol=2e-4, rtol=2e-4), \
        f"max abs err {jnp.max(jnp.abs(out - ref))}"

    # Case 2: batch not divisible by the tile -> multi-step grid + masked tail.
    B2 = 100
    kv2, ka2, kt2, ku2 = jax.random.split(jax.random.PRNGKey(1), 4)
    video2 = jax.random.normal(kv2, (B2, E), jnp.float32)
    audio2 = jax.random.normal(ka2, (B2, E), jnp.float32)
    text2 = jax.random.normal(kt2, (B2, E), jnp.float32)
    user2 = jax.random.normal(ku2, (B2, E), jnp.float32)

    out2 = jax.block_until_ready(
        fusion_predictor(video2, audio2, text2, user2, params, batch_tile=32))
    ref2 = reference(video2, audio2, text2, user2, params)
    assert out2.shape == (B2, 1), out2.shape
    assert jnp.allclose(out2, ref2, atol=2e-4, rtol=2e-4), \
        f"max abs err {jnp.max(jnp.abs(out2 - ref2))}"

    print("KERNEL_OK")
</pallas_src>

<mosaic_0001>
module attributes {stable_mosaic.version = 11 : i64} {
  func.func @kernel(%arg0: i32, %arg1: memref<16x128xf32, #tpu.memory_space<vmem>>, %arg2: memref<16x128xf32, #tpu.memory_space<vmem>>, %arg3: memref<16x128xf32, #tpu.memory_space<vmem>>, %arg4: memref<16x128xf32, #tpu.memory_space<vmem>>, %arg5: memref<512x512xbf16, #tpu.memory_space<vmem>>, %arg6: memref<1x512xf32, #tpu.memory_space<vmem>>, %arg7: memref<1x512xf32, #tpu.memory_space<vmem>>, %arg8: memref<1x1xf32, #tpu.memory_space<smem>>, %arg9: memref<16x1xf32, #tpu.memory_space<vmem>>, %arg10: memref<16x512xbf16, #tpu.memory_space<vmem>>) attributes {dimension_semantics = [#tpu.dimension_semantics<parallel>], iteration_bounds = array<i64: 1>, scalar_prefetch = 0 : i64, scratch_operands = 1 : i64, tpu.core_type = #tpu.core_type<tc>, window_params = [{transform_indices = @transform_0, window_bounds = array<i64: 16, 128>}, {transform_indices = @transform_1, window_bounds = array<i64: 16, 128>}, {transform_indices = @transform_2, window_bounds = array<i64: 16, 128>}, {transform_indices = @transform_3, window_bounds = array<i64: 16, 128>}, {pipeline_mode = #tpu.pipeline_mode<synchronous>, transform_indices = @transform_4, window_bounds = array<i64: 512, 512>}, {pipeline_mode = #tpu.pipeline_mode<synchronous>, transform_indices = @transform_5, window_bounds = array<i64: 1, 512>}, {pipeline_mode = #tpu.pipeline_mode<synchronous>, transform_indices = @transform_6, window_bounds = array<i64: 1, 512>}, {transform_indices = @transform_7, window_bounds = array<i64: 1, 1>}, {transform_indices = @transform_8, window_bounds = array<i64: 16, 1>}]} {
    %c0 = arith.constant 0 : index
    %c0_0 = arith.constant 0 : index
    %0 = vector.load %arg1[%c0, %c0_0] : memref<16x128xf32, #tpu.memory_space<vmem>>, vector<16x128xf32>
    %1 = arith.truncf %0 : vector<16x128xf32> to vector<16x128xbf16>
    %c0_1 = arith.constant 0 : index
    %c0_2 = arith.constant 0 : index
    %2 = vector.load %arg10[%c0_1, %c0_2] : memref<16x512xbf16, #tpu.memory_space<vmem>>, vector<16x128xbf16>
    tpu.vector_store %arg10[%c0_1, %c0_2], %1 {strides = array<i32>} : memref<16x512xbf16, #tpu.memory_space<vmem>>, vector<16x128xbf16>,
    %c0_3 = arith.constant 0 : index
    %c0_4 = arith.constant 0 : index
    %3 = vector.load %arg2[%c0_3, %c0_4] : memref<16x128xf32, #tpu.memory_space<vmem>>, vector<16x128xf32>
    %4 = arith.truncf %3 : vector<16x128xf32> to vector<16x128xbf16>
    %c0_5 = arith.constant 0 : index
    %c128 = arith.constant 128 : index
    %5 = vector.load %arg10[%c0_5, %c128] : memref<16x512xbf16, #tpu.memory_space<vmem>>, vector<16x128xbf16>
    tpu.vector_store %arg10[%c0_5, %c128], %4 {strides = array<i32>} : memref<16x512xbf16, #tpu.memory_space<vmem>>, vector<16x128xbf16>,
    %c0_6 = arith.constant 0 : index
    %c0_7 = arith.constant 0 : index
    %6 = vector.load %arg3[%c0_6, %c0_7] : memref<16x128xf32, #tpu.memory_space<vmem>>, vector<16x128xf32>
    %7 = arith.truncf %6 : vector<16x128xf32> to vector<16x128xbf16>
    %c0_8 = arith.constant 0 : index
    %c256 = arith.constant 256 : index
    %8 = vector.load %arg10[%c0_8, %c256] : memref<16x512xbf16, #tpu.memory_space<vmem>>, vector<16x128xbf16>
    tpu.vector_store %arg10[%c0_8, %c256], %7 {strides = array<i32>} : memref<16x512xbf16, #tpu.memory_space<vmem>>, vector<16x128xbf16>,
    %c0_9 = arith.constant 0 : index
    %c0_10 = arith.constant 0 : index
    %9 = vector.load %arg4[%c0_9, %c0_10] : memref<16x128xf32, #tpu.memory_space<vmem>>, vector<16x128xf32>
    %10 = arith.truncf %9 : vector<16x128xf32> to vector<16x128xbf16>
    %c0_11 = arith.constant 0 : index
    %c384 = arith.constant 384 : index
    %11 = vector.load %arg10[%c0_11, %c384] : memref<16x512xbf16, #tpu.memory_space<vmem>>, vector<16x128xbf16>
    tpu.vector_store %arg10[%c0_11, %c384], %10 {strides = array<i32>} : memref<16x512xbf16, #tpu.memory_space<vmem>>, vector<16x128xbf16>,
    %c0_12 = arith.constant 0 : index
    %c0_13 = arith.constant 0 : index
    %12 = vector.load %arg10[%c0_12, %c0_13] : memref<16x512xbf16, #tpu.memory_space<vmem>>, vector<16x512xbf16>
    %c0_14 = arith.constant 0 : index
    %c0_15 = arith.constant 0 : index
    %13 = vector.load %arg5[%c0_14, %c0_15] : memref<512x512xbf16, #tpu.memory_space<vmem>>, vector<512x512xbf16>
    %cst = arith.constant dense<0.000000e+00> : vector<16x512xf32>
    %14 = tpu.matmul %12, %13, %cst {dimension_numbers = #tpu.dot_dimension_numbers<[1], [0], [0], [1], [0, 0, 1, 1], [], []>} : vector<16x512xbf16>, vector<512x512xbf16>, vector<16x512xf32> -> vector<16x512xf32>
    %c0_16 = arith.constant 0 : index
    %c0_17 = arith.constant 0 : index
    %15 = vector.load %arg6[%c0_16, %c0_17] : memref<1x512xf32, #tpu.memory_space<vmem>>, vector<1x512xf32>
    %16 = vector.broadcast %15 : vector<1x512xf32> to vector<16x512xf32>
    %17 = arith.addf %14, %16 : vector<16x512xf32>
    %cst_18 = arith.constant 0.000000e+00 : f32
    %18 = vector.broadcast %cst_18 : f32 to vector<16x512xf32>
    %19 = arith.maximumf %17, %18 : vector<16x512xf32>
    %c0_19 = arith.constant 0 : index
    %c0_20 = arith.constant 0 : index
    %20 = vector.load %arg7[%c0_19, %c0_20] : memref<1x512xf32, #tpu.memory_space<vmem>>, vector<1x512xf32>
    %21 = vector.broadcast %20 : vector<1x512xf32> to vector<16x512xf32>
    %22 = arith.mulf %19, %21 : vector<16x512xf32>
    %cst_21 = arith.constant dense<0.000000e+00> : vector<16xf32>
    %23 = vector.multi_reduction <add>, %22, %cst_21 [1] : vector<16x512xf32> to vector<16xf32>
    %24 = vector.shape_cast %23 : vector<16xf32> to vector<16x1xf32>
    %c0_22 = arith.constant 0 : index
    %c0_23 = arith.constant 0 : index
    %25 = memref.load %arg8[%c0_22, %c0_23] : memref<1x1xf32, #tpu.memory_space<smem>>
    %26 = vector.broadcast %25 : f32 to vector<16x1xf32>
    %27 = arith.addf %24, %26 : vector<16x1xf32>
    %28 = arith.negf %27 : vector<16x1xf32>
    %29 = math.exp %28 : vector<16x1xf32>
    %cst_24 = arith.constant 1.000000e+00 : f32
    %30 = vector.broadcast %cst_24 : f32 to vector<16x1xf32>
    %31 = arith.addf %30, %29 : vector<16x1xf32>
    %32 = arith.divf %30, %31 : vector<16x1xf32>
    %c0_25 = arith.constant 0 : index
    %c0_26 = arith.constant 0 : index
    %33 = vector.load %arg9[%c0_25, %c0_26] : memref<16x1xf32, #tpu.memory_space<vmem>>, vector<16x1xf32>
    tpu.vector_store %arg9[%c0_25, %c0_26], %32 {strides = array<i32>} : memref<16x1xf32, #tpu.memory_space<vmem>>, vector<16x1xf32>,
    return
  }
  func.func @transform_0(%arg0: i32) -> (i32, i32) {
    %c0_i32 = arith.constant 0 : i32
    %c0_i32_0 = arith.constant 0 : i32
    return %arg0, %c0_i32 : i32, i32
  }
  func.func @transform_1(%arg0: i32) -> (i32, i32) {
    %c0_i32 = arith.constant 0 : i32
    %c0_i32_0 = arith.constant 0 : i32
    return %arg0, %c0_i32 : i32, i32
  }
  func.func @transform_2(%arg0: i32) -> (i32, i32) {
    %c0_i32 = arith.constant 0 : i32
    %c0_i32_0 = arith.constant 0 : i32
    return %arg0, %c0_i32 : i32, i32
  }
  func.func @transform_3(%arg0: i32) -> (i32, i32) {
    %c0_i32 = arith.constant 0 : i32
    %c0_i32_0 = arith.constant 0 : i32
    return %arg0, %c0_i32 : i32, i32
  }
  func.func @transform_4(%arg0: i32) -> (i32, i32) {
    %c0_i32 = arith.constant 0 : i32
    %c0_i32_0 = arith.constant 0 : i32
    %c0_i32_1 = arith.constant 0 : i32
    return %c0_i32, %c0_i32_0 : i32, i32
  }
  func.func @transform_5(%arg0: i32) -> (i32, i32) {
    %c0_i32 = arith.constant 0 : i32
    %c0_i32_0 = arith.constant 0 : i32
    %c0_i32_1 = arith.constant 0 : i32
    return %c0_i32, %c0_i32_0 : i32, i32
  }
  func.func @transform_6(%arg0: i32) -> (i32, i32) {
    %c0_i32 = arith.constant 0 : i32
    %c0_i32_0 = arith.constant 0 : i32
    %c0_i32_1 = arith.constant 0 : i32
    return %c0_i32, %c0_i32_0 : i32, i32
  }
  func.func @transform_7(%arg0: i32) -> (i32, i32) {
    %c0_i32 = arith.constant 0 : i32
    %c0_i32_0 = arith.constant 0 : i32
    %c0_i32_1 = arith.constant 0 : i32
    return %c0_i32, %c0_i32_0 : i32, i32
  }
  func.func @transform_8(%arg0: i32) -> (i32, i32) {
    %c0_i32 = arith.constant 0 : i32
    %c0_i32_0 = arith.constant 0 : i32
    return %arg0, %c0_i32 : i32, i32
  }
}

</mosaic_0001>

<llo_original>
// kernel: tpu_custom_call.1
$region0: #{tpu_custom_call.1}
  #allocation0 [shape = 'u32[]', space=smem, size = 0x4, offset = 0x4, fixed_abs, tag = 'smem constant byte address 0x4 - core index']
  #allocation1 [shape = 'u32[144,128]{1,0:T(1,128)}', space=vmem, size = 0x12000, scoped, tag = 'internal scratch']
  #allocation2 [shape = 'bf16[16,512]{1,0:T(8,128)(2,1)}', space=vmem, size = 0x4000, scoped, tag = 'scratch operand']
  #allocation3 [shape = 'f32[1,1]{1,0:T(1,128)S(6)}', space=smem, size = 0x200, scoped, tag = 'scoped memory for tpu_custom_call.1']
  %s0 = inlined_call_operand.hbm [shape: f32[8,128], index: 0, kind: input, shape index: {}]
  %s1 = inlined_call_operand.hbm [shape: f32[8,128], index: 1, kind: input, shape index: {}]
  %s2 = inlined_call_operand.hbm [shape: f32[8,128], index: 2, kind: input, shape index: {}]
  %s3 = inlined_call_operand.hbm [shape: f32[8,128], index: 3, kind: input, shape index: {}]
  %s4 = inlined_call_operand.hbm [shape: bf16[512,512], index: 4, kind: input, shape index: {}]
  %s5 = inlined_call_operand.vmem [shape: f32[1,512], index: 5, kind: input, shape index: {}]
  %s6 = inlined_call_operand.vmem [shape: f32[1,512], index: 6, kind: input, shape index: {}]
  %s7 = inlined_call_operand.<no memory space> [shape: f32[1,1], index: 7, kind: input, shape index: {}]
  %s8 = inlined_call_operand.vmem [shape: f32[8,1], index: 8, kind: output, shape index: {}]
  %s9 = sld [smem:[#allocation0]]
  $region96: #{tpu_custom_call.1} parent=0
    _
  %s11 = ssub.s32 1, %s9
  %s12 = scalar_select 0, %s11, %s9
  %13 = sst [smem:[#allocation3]] %s7
  $region1: #{tpu_custom_call.1} parent=0
    #allocation4 [shape = 'u8[8192]{0}', space=vmem, size = 0x2000, scoped, tag = 'input window, operand 0, single buffered']
    #allocation5 [shape = 's32[1]{0}', space=sflag, size = 0x4, scoped, tag = 'scoped memory for tpu_custom_call.1']
    #allocation6 [shape = 'u8[8192]{0}', space=vmem, size = 0x2000, scoped, tag = 'input window, operand 1, single buffered']
    #allocation7 [shape = 's32[1]{0}', space=sflag, size = 0x4, scoped, tag = 'scoped memory for tpu_custom_call.1']
    #allocation8 [shape = 'u8[8192]{0}', space=vmem, size = 0x2000, scoped, tag = 'input window, operand 2, single buffered']
    #allocation9 [shape = 'u8[8192]{0}', space=vmem, size = 0x2000, scoped, tag = 'input window, operand 3, single buffered']
    #allocation10 [shape = 's32[1]{0}', space=sflag, size = 0x4, scoped, tag = 'scoped memory for tpu_custom_call.1']
    #allocation11 [shape = 'u8[524288]{0}', space=vmem, size = 0x80000, scoped, tag = 'input window, operand 4, single buffered']
    #allocation12 [shape = 'u8[8192]{0}', space=vmem, size = 0x2000, scoped, tag = 'output window, operand 0, single buffered']
    %14 = vsyncpa [#allocation5], 0
    %15 = vsyncpa [#allocation7], 0
    %16 = vsyncpa [#allocation10], 0
    // Predicated region
    $region2: #{tpu_custom_call.1} parent=1 // pred_check
      _
    $region3: #{tpu_custom_call.1} parent=1 // pred_check_branch
      %18 = sbr.rel (0) target = $region5
    $region4: #{tpu_custom_call.1} parent=1 // pred_region
      %s20 = ssub.s32 256, 128
      %21 = vsyncadd [#allocation5], %s20
      %s22 = sshll.u32 [#allocation4], 4
      %s23 = int_to_ptr.vmem [resolvable:$true] %s22
      %28 = dma.hbm_to_vmem [thread:$0]  %s0, 128, %s23, [#allocation5], 128, 128, 8
    $region5: #{tpu_custom_call.1} parent=1 // pred_fallthru
      _
    // Predicated region
    $region6: #{tpu_custom_call.1} parent=1 // pred_check
      _
    $region7: #{tpu_custom_call.1} parent=1 // pred_check_branch
      %30 = sbr.rel (0) target = $region9
    $region8: #{tpu_custom_call.1} parent=1 // pred_region
      %s32 = ssub.s32 256, 128
      %33 = vsyncadd [#allocation7], %s32
      %s34 = sshll.u32 [#allocation6], 4
      %s35 = int_to_ptr.vmem [resolvable:$true] %s34
      %40 = dma.hbm_to_vmem [thread:$0]  %s1, 128, %s35, [#allocation7], 128, 128, 8
    $region9: #{tpu_custom_call.1} parent=1 // pred_fallthru
      _
    // Predicated region
    $region10: #{tpu_custom_call.1} parent=1 // pred_check
      _
    $region11: #{tpu_custom_call.1} parent=1 // pred_check_branch
      %42 = sbr.rel (0) target = $region13
    $region12: #{tpu_custom_call.1} parent=1 // pred_region
      %s44 = ssub.s32 256, 128
      %45 = vsyncadd [#allocation7], %s44
      %s46 = sshll.u32 [#allocation8], 4
      %s47 = int_to_ptr.vmem [resolvable:$true] %s46
      %52 = dma.hbm_to_vmem [thread:$0]  %s2, 128, %s47, [#allocation7], 128, 128, 8
    $region13: #{tpu_custom_call.1} parent=1 // pred_fallthru
      _
    // Predicated region
    $region14: #{tpu_custom_call.1} parent=1 // pred_check
      _
    $region15: #{tpu_custom_call.1} parent=1 // pred_check_branch
      %54 = sbr.rel (0) target = $region17
    $region16: #{tpu_custom_call.1} parent=1 // pred_region
      %s56 = ssub.s32 256, 128
      %57 = vsyncadd [#allocation10], %s56
      %s58 = sshll.u32 [#allocation9], 4
      %s59 = int_to_ptr.vmem [resolvable:$true] %s58
      %64 = dma.hbm_to_vmem [thread:$0]  %s3, 128, %s59, [#allocation10], 128, 128, 8
    $region17: #{tpu_custom_call.1} parent=1 // pred_fallthru
      _
    // Predicated region
    $region18: #{tpu_custom_call.1} parent=1 // pred_check
      _
    $region19: #{tpu_custom_call.1} parent=1 // pred_check_branch
      %66 = sbr.rel (0) target = $region21
    $region20: #{tpu_custom_call.1} parent=1 // pred_region
      %s68 = ssub.s32 16384, 16384
      %69 = vsyncadd [#allocation10], %s68
      %s70 = sshll.u32 [#allocation11], 4
      %s71 = int_to_ptr.vmem [resolvable:$true] %s70
      %76 = dma.hbm_to_vmem [thread:$0]  %s4, 16384, %s71, [#allocation10], 256, 256, 16
    $region21: #{tpu_custom_call.1} parent=1 // pred_fallthru
      _
    // Predicated region
    $region22: #{tpu_custom_call.1} parent=1 // pred_check
      _
    $region23: #{tpu_custom_call.1} parent=1 // pred_check_branch
      %78 = sbr.rel (0) target = $region25
    $region24: #{tpu_custom_call.1} parent=1 // pred_region
      _
    $region25: #{tpu_custom_call.1} parent=1 // pred_fallthru
      _
    // Predicated region
    $region26: #{tpu_custom_call.1} parent=1 // pred_check
      _
    $region27: #{tpu_custom_call.1} parent=1 // pred_check_branch
      %80 = sbr.rel (0) target = $region29
    $region28: #{tpu_custom_call.1} parent=1 // pred_region
      _
    $region29: #{tpu_custom_call.1} parent=1 // pred_fallthru
      _
    // Predicated region
    $region30: #{tpu_custom_call.1} parent=1 // pred_check
      _
    $region31: #{tpu_custom_call.1} parent=1 // pred_check_branch
      %82 = sbr.rel (0) target = $region33
    $region32: #{tpu_custom_call.1} parent=1 // pred_region
      _
    $region33: #{tpu_custom_call.1} parent=1 // pred_fallthru
      _
    // Predicated region
    $region34: #{tpu_custom_call.1} parent=1 // pred_check
      _
    $region35: #{tpu_custom_call.1} parent=1 // pred_check_branch
      %84 = sbr.rel (0) target = $region37
    $region36: #{tpu_custom_call.1} parent=1 // pred_region
      %85 = dma.done [#allocation5], 256
    $region37: #{tpu_custom_call.1} parent=1 // pred_fallthru
      _
    // Predicated region
    $region38: #{tpu_custom_call.1} parent=1 // pred_check
      _
    $region39: #{tpu_custom_call.1} parent=1 // pred_check_branch
      %87 = sbr.rel (0) target = $region41
    $region40: #{tpu_custom_call.1} parent=1 // pred_region
      %88 = dma.done [#allocation7], 256
    $region41: #{tpu_custom_call.1} parent=1 // pred_fallthru
      _
    // Predicated region
    $region42: #{tpu_custom_call.1} parent=1 // pred_check
      _
    $region43: #{tpu_custom_call.1} parent=1 // pred_check_branch
      %90 = sbr.rel (0) target = $region45
    $region44: #{tpu_custom_call.1} parent=1 // pred_region
      %91 = dma.done [#allocation7], 256
    $region45: #{tpu_custom_call.1} parent=1 // pred_fallthru
      _
    // Predicated region
    $region46: #{tpu_custom_call.1} parent=1 // pred_check
      _
    $region47: #{tpu_custom_call.1} parent=1 // pred_check_branch
      %93 = sbr.rel (0) target = $region49
    $region48: #{tpu_custom_call.1} parent=1 // pred_region
      %94 = dma.done [#allocation10], 256
    $region49: #{tpu_custom_call.1} parent=1 // pred_fallthru
      _
    // Predicated region
    $region50: #{tpu_custom_call.1} parent=1 // pred_check
      _
    $region51: #{tpu_custom_call.1} parent=1 // pred_check_branch
      %96 = sbr.rel (0) target = $region53
    $region52: #{tpu_custom_call.1} parent=1 // pred_region
      %97 = dma.done [#allocation10], 16384
    $region53: #{tpu_custom_call.1} parent=1 // pred_fallthru
      _
    %v98 = vld [vmem:[#allocation4] sm:$0xff]
    %v99 = vld [vmem:[#allocation4 + $0x8] sm:$0xff]
    %v100 = vpack.c.bf16 %v99, %v98
    %v102 = vunpack.c.l.b16 %v100
    %v103 = vunpack.c.h.b16 %v100
    %v104 = vpack.c.b16 %v102, %v102
    %v105 = vpack.c.b16 %v103, %v103
    %108 = vst [vmem:[#allocation2] sm:$0xf] %v104
    %109 = vst [vmem:[#allocation2 + $0x10] sm:$0xf] %v105
    %v110 = vld [vmem:[#allocation6] sm:$0xff]
    %v111 = vld [vmem:[#allocation6 + $0x8] sm:$0xff]
    %v112 = vpack.c.bf16 %v111, %v110
    %v114 = vunpack.c.l.b16 %v112
    %v115 = vunpack.c.h.b16 %v112
    %v116 = vpack.c.b16 %v114, %v114
    %v117 = vpack.c.b16 %v115, %v115
    %120 = vst [vmem:[#allocation2 + $0x4] sm:$0xf] %v116
    %121 = vst [vmem:[#allocation2 + $0x14] sm:$0xf] %v117
    %v122 = vld [vmem:[#allocation8] sm:$0xff]
    %v123 = vld [vmem:[#allocation8 + $0x8] sm:$0xff]
    %v124 = vpack.c.bf16 %v123, %v122
    %v126 = vunpack.c.l.b16 %v124
    %v127 = vunpack.c.h.b16 %v124
    %v128 = vpack.c.b16 %v126, %v126
    %v129 = vpack.c.b16 %v127, %v127
    %132 = vst [vmem:[#allocation2 + $0x8] sm:$0xf] %v128
    %133 = vst [vmem:[#allocation2 + $0x18] sm:$0xf] %v129
    %v134 = vld [vmem:[#allocation9] sm:$0xff]
    %v135 = vld [vmem:[#allocation9 + $0x8] sm:$0xff]
    %v136 = vpack.c.bf16 %v135, %v134
    %v138 = vunpack.c.l.b16 %v136
    %v139 = vunpack.c.h.b16 %v136
    %v140 = vpack.c.b16 %v138, %v138
    %v141 = vpack.c.b16 %v139, %v139
    %144 = vst [vmem:[#allocation2 + $0xc] sm:$0xf] %v140
    %145 = vst [vmem:[#allocation2 + $0x1c] sm:$0xf] %v141
    %v146 = vld [vmem:[#allocation2] sm:$0xff]
    %v147 = vld [vmem:[#allocation2 + $0x8] sm:$0xff]
    %v148 = vld [vmem:[#allocation2 + $0x10] sm:$0xff]
    %v149 = vld [vmem:[#allocation2 + $0x18] sm:$0xff]
    %v150 = vld [vmem:[#allocation11] sm:$0xff]
    %v151 = vld [vmem:[#allocation11 + $0x8] sm:$0xff]
    %v152 = vld [vmem:[#allocation11 + $0x10] sm:$0xff]
    %v153 = vld [vmem:[#allocation11 + $0x18] sm:$0xff]
    %v154 = vld [vmem:[#allocation11 + $0x20] sm:$0xff]
    %v155 = vld [vmem:[#allocation11 + $0x28] sm:$0xff]
    %v156 = vld [vmem:[#allocation11 + $0x30] sm:$0xff]
    %v157 = vld [vmem:[#allocation11 + $0x38] sm:$0xff]
    %v158 = vld [vmem:[#allocation11 + $0x40] sm:$0xff]
    %v159 = vld [vmem:[#allocation11 + $0x48] sm:$0xff]
    %v160 = vld [vmem:[#allocation11 + $0x50] sm:$0xff]
    %v161 = vld [vmem:[#allocation11 + $0x58] sm:$0xff]
    %v162 = vld [vmem:[#allocation11 + $0x60] sm:$0xff]
    %v163 = vld [vmem:[#allocation11 + $0x68] sm:$0xff]
    %v164 = vld [vmem:[#allocation11 + $0x70] sm:$0xff]
    %v165 = vld [vmem:[#allocation11 + $0x78] sm:$0xff]
    %v166 = vld [vmem:[#allocation11 + $0x80] sm:$0xff]
    %v167 = vld [vmem:[#allocation11 + $0x88] sm:$0xff]
    %v168 = vld [vmem:[#allocation11 + $0x90] sm:$0xff]
    %v169 = vld [vmem:[#allocation11 + $0x98] sm:$0xff]
    %v170 = vld [vmem:[#allocation11 + $0xa0] sm:$0xff]
    %v171 = vld [vmem:[#allocation11 + $0xa8] sm:$0xff]
    %v172 = vld [vmem:[#allocation11 + $0xb0] sm:$0xff]
    %v173 = vld [vmem:[#allocation11 + $0xb8] sm:$0xff]
    %v174 = vld [vmem:[#allocation11 + $0xc0] sm:$0xff]
    %v175 = vld [vmem:[#allocation11 + $0xc8] sm:$0xff]
    %v176 = vld [vmem:[#allocation11 + $0xd0] sm:$0xff]
    %v177 = vld [vmem:[#allocation11 + $0xd8] sm:$0xff]
    %v178 = vld [vmem:[#allocation11 + $0xe0] sm:$0xff]
    %v179 = vld [vmem:[#allocation11 + $0xe8] sm:$0xff]
    %v180 = vld [vmem:[#allocation11 + $0xf0] sm:$0xff]
    %v181 = vld [vmem:[#allocation11 + $0xf8] sm:$0xff]
    %v182 = vld [vmem:[#allocation11 + $0x100] sm:$0xff]
    %v183 = vld [vmem:[#allocation11 + $0x108] sm:$0xff]
    %v184 = vld [vmem:[#allocation11 + $0x110] sm:$0xff]
    %v185 = vld [vmem:[#allocation11 + $0x118] sm:$0xff]
    %v186 = vld [vmem:[#allocation11 + $0x120] sm:$0xff]
    %v187 = vld [vmem:[#allocation11 + $0x128] sm:$0xff]
    %v188 = vld [vmem:[#allocation11 + $0x130] sm:$0xff]
    %v189 = vld [vmem:[#allocation11 + $0x138] sm:$0xff]
    %v190 = vld [vmem:[#allocation11 + $0x140] sm:$0xff]
    %v191 = vld [vmem:[#allocation11 + $0x148] sm:$0xff]
    %v192 = vld [vmem:[#allocation11 + $0x150] sm:$0xff]
    %v193 = vld [vmem:[#allocation11 + $0x158] sm:$0xff]
    %v194 = vld [vmem:[#allocation11 + $0x160] sm:$0xff]
    %v195 = vld [vmem:[#allocation11 + $0x168] sm:$0xff]
    %v196 = vld [vmem:[#allocation11 + $0x170] sm:$0xff]
    %v197 = vld [vmem:[#allocation11 + $0x178] sm:$0xff]
    %v198 = vld [vmem:[#allocation11 + $0x180] sm:$0xff]
    %v199 = vld [vmem:[#allocation11 + $0x188] sm:$0xff]
    %v200 = vld [vmem:[#allocation11 + $0x190] sm:$0xff]
    %v201 = vld [vmem:[#allocation11 + $0x198] sm:$0xff]
    %v202 = vld [vmem:[#allocation11 + $0x1a0] sm:$0xff]
    %v203 = vld [vmem:[#allocation11 + $0x1a8] sm:$0xff]
    %v204 = vld [vmem:[#allocation11 + $0x1b0] sm:$0xff]
    %v205 = vld [vmem:[#allocation11 + $0x1b8] sm:$0xff]
    %v206 = vld [vmem:[#allocation11 + $0x1c0] sm:$0xff]
    %v207 = vld [vmem:[#allocation11 + $0x1c8] sm:$0xff]
    %v208 = vld [vmem:[#allocation11 + $0x1d0] sm:$0xff]
    %v209 = vld [vmem:[#allocation11 + $0x1d8] sm:$0xff]
    %v210 = vld [vmem:[#allocation11 + $0x1e0] sm:$0xff]
    %v211 = vld [vmem:[#allocation11 + $0x1e8] sm:$0xff]
    %v212 = vld [vmem:[#allocation11 + $0x1f0] sm:$0xff]
    %v213 = vld [vmem:[#allocation11 + $0x1f8] sm:$0xff]
    %v214 = vld [vmem:[#allocation11 + $0x200] sm:$0xff]
    %v215 = vld [vmem:[#allocation11 + $0x208] sm:$0xff]
    %v216 = vld [vmem:[#allocation11 + $0x210] sm:$0xff]
    %v217 = vld [vmem:[#allocation11 + $0x218] sm:$0xff]
    %v218 = vld [vmem:[#allocation11 + $0x220] sm:$0xff]
    %v219 = vld [vmem:[#allocation11 + $0x228] sm:$0xff]
    %v220 = vld [vmem:[#allocation11 + $0x230] sm:$0xff]
    %v221 = vld [vmem:[#allocation11 + $0x238] sm:$0xff]
    %v222 = vld [vmem:[#allocation11 + $0x240] sm:$0xff]
    %v223 = vld [vmem:[#allocation11 + $0x248] sm:$0xff]
    %v224 = vld [vmem:[#allocation11 + $0x250] sm:$0xff]
    %v225 = vld [vmem:[#allocation11 + $0x258] sm:$0xff]
    %v226 = vld [vmem:[#allocation11 + $0x260] sm:$0xff]
    %v227 = vld [vmem:[#allocation11 + $0x268] sm:$0xff]
    %v228 = vld [vmem:[#allocation11 + $0x270] sm:$0xff]
    %v229 = vld [vmem:[#allocation11 + $0x278] sm:$0xff]
    %v230 = vld [vmem:[#allocation11 + $0x280] sm:$0xff]
    %v231 = vld [vmem:[#allocation11 + $0x288] sm:$0xff]
    %v232 = vld [vmem:[#allocation11 + $0x290] sm:$0xff]
    %v233 = vld [vmem:[#allocation11 + $0x298] sm:$0xff]
    %v234 = vld [vmem:[#allocation11 + $0x2a0] sm:$0xff]
    %v235 = vld [vmem:[#allocation11 + $0x2a8] sm:$0xff]
    %v236 = vld [vmem:[#allocation11 + $0x2b0] sm:$0xff]
    %v237 = vld [vmem:[#allocation11 + $0x2b8] sm:$0xff]
    %v238 = vld [vmem:[#allocation11 + $0x2c0] sm:$0xff]
    %v239 = vld [vmem:[#allocation11 + $0x2c8] sm:$0xff]
    %v240 = vld [vmem:[#allocation11 + $0x2d0] sm:$0xff]
    %v241 = vld [vmem:[#allocation11 + $0x2d8] sm:$0xff]
    %v242 = vld [vmem:[#allocation11 + $0x2e0] sm:$0xff]
    %v243 = vld [vmem:[#allocation11 + $0x2e8] sm:$0xff]
    %v244 = vld [vmem:[#allocation11 + $0x2f0] sm:$0xff]
    %v245 = vld [vmem:[#allocation11 + $0x2f8] sm:$0xff]
    %v246 = vld [vmem:[#allocation11 + $0x300] sm:$0xff]
    %v247 = vld [vmem:[#allocation11 + $0x308] sm:$0xff]
    %v248 = vld [vmem:[#allocation11 + $0x310] sm:$0xff]
    %v249 = vld [vmem:[#allocation11 + $0x318] sm:$0xff]
    %v250 = vld [vmem:[#allocation11 + $0x320] sm:$0xff]
    %v251 = vld [vmem:[#allocation11 + $0x328] sm:$0xff]
    %v252 = vld [vmem:[#allocation11 + $0x330] sm:$0xff]
    %v253 = vld [vmem:[#allocation11 + $0x338] sm:$0xff]
    %v254 = vld [vmem:[#allocation11 + $0x340] sm:$0xff]
    %v255 = vld [vmem:[#allocation11 + $0x348] sm:$0xff]
    %v256 = vld [vmem:[#allocation11 + $0x350] sm:$0xff]
    %v257 = vld [vmem:[#allocation11 + $0x358] sm:$0xff]
    %v258 = vld [vmem:[#allocation11 + $0x360] sm:$0xff]
    %v259 = vld [vmem:[#allocation11 + $0x368] sm:$0xff]
    %v260 = vld [vmem:[#allocation11 + $0x370] sm:$0xff]
    %v261 = vld [vmem:[#allocation11 + $0x378] sm:$0xff]
    %v262 = vld [vmem:[#allocation11 + $0x380] sm:$0xff]
    %v263 = vld [vmem:[#allocation11 + $0x388] sm:$0xff]
    %v264 = vld [vmem:[#allocation11 + $0x390] sm:$0xff]
    %v265 = vld [vmem:[#allocation11 + $0x398] sm:$0xff]
    %v266 = vld [vmem:[#allocation11 + $0x3a0] sm:$0xff]
    %v267 = vld [vmem:[#allocation11 + $0x3a8] sm:$0xff]
    %v268 = vld [vmem:[#allocation11 + $0x3b0] sm:$0xff]
    %v269 = vld [vmem:[#allocation11 + $0x3b8] sm:$0xff]
    %v270 = vld [vmem:[#allocation11 + $0x3c0] sm:$0xff]
    %v271 = vld [vmem:[#allocation11 + $0x3c8] sm:$0xff]
    %v272 = vld [vmem:[#allocation11 + $0x3d0] sm:$0xff]
    %v273 = vld [vmem:[#allocation11 + $0x3d8] sm:$0xff]
    %v274 = vld [vmem:[#allocation11 + $0x3e0] sm:$0xff]
    %v275 = vld [vmem:[#allocation11 + $0x3e8] sm:$0xff]
    %v276 = vld [vmem:[#allocation11 + $0x3f0] sm:$0xff]
    %v277 = vld [vmem:[#allocation11 + $0x3f8] sm:$0xff]
    %v278 = vld [vmem:[%s5] sm:$0xf]
    %v280 = vlaneseq
    %v281 = vshrl.u32 %v280, 7
    %v282 = vsub.s32 0, %v281
    %v283 = vrot.slane %v278, %v282
    %v284 = vlaneseq
    %v285 = vshrl.u32 %v284, 7
    %v286 = vsub.s32 1, %v285
    %v287 = vrot.slane %v278, %v286
    %v288 = vlaneseq
    %v289 = vshrl.u32 %v288, 7
    %v290 = vsub.s32 2, %v289
    %v291 = vrot.slane %v278, %v290
    %v292 = vlaneseq
    %v293 = vshrl.u32 %v292, 7
    %v294 = vsub.s32 3, %v293
    %v295 = vrot.slane %v278, %v294
    %v304 = vunpack.c.l.b16 %v146
    %v305 = vunpack.c.h.b16 %v146
    %v306 = vunpack.c.l.b16 %v147
    %v307 = vunpack.c.h.b16 %v147
    %v308 = vunpack.c.l.b16 %v148
    %v309 = vunpack.c.h.b16 %v148
    %v310 = vunpack.c.l.b16 %v149
    %v311 = vunpack.c.h.b16 %v149
    %v312 = vpack.c.b16 %v308, %v304
    %v313 = vpack.c.b16 %v309, %v305
    %v314 = vpack.c.b16 %v310, %v306
    %v315 = vpack.c.b16 %v311, %v307
    %v448 = vunpack.c.l.b16 %v150
    %v449 = vunpack.c.h.b16 %v150
    %v450 = vunpack.c.l.b16 %v151
    %v451 = vunpack.c.h.b16 %v151
    %v452 = vunpack.c.l.b16 %v152
    %v453 = vunpack.c.h.b16 %v152
    %v454 = vunpack.c.l.b16 %v153
    %v455 = vunpack.c.h.b16 %v153
    %v456 = vunpack.c.l.b16 %v154
    %v457 = vunpack.c.h.b16 %v154
    %v458 = vunpack.c.l.b16 %v155
    %v459 = vunpack.c.h.b16 %v155
    %v460 = vunpack.c.l.b16 %v156
    %v461 = vunpack.c.h.b16 %v156
    %v462 = vunpack.c.l.b16 %v157
    %v463 = vunpack.c.h.b16 %v157
    %v464 = vunpack.c.l.b16 %v158
    %v465 = vunpack.c.h.b16 %v158
    %v466 = vunpack.c.l.b16 %v159
    %v467 = vunpack.c.h.b16 %v159
    %v468 = vunpack.c.l.b16 %v160
    %v469 = vunpack.c.h.b16 %v160
    %v470 = vunpack.c.l.b16 %v161
    %v471 = vunpack.c.h.b16 %v161
    %v472 = vunpack.c.l.b16 %v162
    %v473 = vunpack.c.h.b16 %v162
    %v474 = vunpack.c.l.b16 %v163
    %v475 = vunpack.c.h.b16 %v163
    %v476 = vunpack.c.l.b16 %v164
    %v477 = vunpack.c.h.b16 %v164
    %v478 = vunpack.c.l.b16 %v165
    %v479 = vunpack.c.h.b16 %v165
    %v480 = vunpack.c.l.b16 %v166
    %v481 = vunpack.c.h.b16 %v166
    %v482 = vunpack.c.l.b16 %v167
    %v483 = vunpack.c.h.b16 %v167
    %v484 = vunpack.c.l.b16 %v168
    %v485 = vunpack.c.h.b16 %v168
    %v486 = vunpack.c.l.b16 %v169
    %v487 = vunpack.c.h.b16 %v169
    %v488 = vunpack.c.l.b16 %v170
    %v489 = vunpack.c.h.b16 %v170
    %v490 = vunpack.c.l.b16 %v171
    %v491 = vunpack.c.h.b16 %v171
    %v492 = vunpack.c.l.b16 %v172
    %v493 = vunpack.c.h.b16 %v172
    %v494 = vunpack.c.l.b16 %v173
    %v495 = vunpack.c.h.b16 %v173
    %v496 = vunpack.c.l.b16 %v174
    %v497 = vunpack.c.h.b16 %v174
    %v498 = vunpack.c.l.b16 %v175
    %v499 = vunpack.c.h.b16 %v175
    %v500 = vunpack.c.l.b16 %v176
    %v501 = vunpack.c.h.b16 %v176
    %v502 = vunpack.c.l.b16 %v177
    %v503 = vunpack.c.h.b16 %v177
    %v504 = vunpack.c.l.b16 %v178
    %v505 = vunpack.c.h.b16 %v178
    %v506 = vunpack.c.l.b16 %v179
    %v507 = vunpack.c.h.b16 %v179
    %v508 = vunpack.c.l.b16 %v180
    %v509 = vunpack.c.h.b16 %v180
    %v510 = vunpack.c.l.b16 %v181
    %v511 = vunpack.c.h.b16 %v181
    %v512 = vunpack.c.l.b16 %v182
    %v513 = vunpack.c.h.b16 %v182
    %v514 = vunpack.c.l.b16 %v183
    %v515 = vunpack.c.h.b16 %v183
    %v516 = vunpack.c.l.b16 %v184
    %v517 = vunpack.c.h.b16 %v184
    %v518 = vunpack.c.l.b16 %v185
    %v519 = vunpack.c.h.b16 %v185
    %v520 = vunpack.c.l.b16 %v186
    %v521 = vunpack.c.h.b16 %v186
    %v522 = vunpack.c.l.b16 %v187
    %v523 = vunpack.c.h.b16 %v187
    %v524 = vunpack.c.l.b16 %v188
    %v525 = vunpack.c.h.b16 %v188
    %v526 = vunpack.c.l.b16 %v189
    %v527 = vunpack.c.h.b16 %v189
    %v528 = vunpack.c.l.b16 %v190
    %v529 = vunpack.c.h.b16 %v190
    %v530 = vunpack.c.l.b16 %v191
    %v531 = vunpack.c.h.b16 %v191
    %v532 = vunpack.c.l.b16 %v192
    %v533 = vunpack.c.h.b16 %v192
    %v534 = vunpack.c.l.b16 %v193
    %v535 = vunpack.c.h.b16 %v193
    %v536 = vunpack.c.l.b16 %v194
    %v537 = vunpack.c.h.b16 %v194
    %v538 = vunpack.c.l.b16 %v195
    %v539 = vunpack.c.h.b16 %v195
    %v540 = vunpack.c.l.b16 %v196
    %v541 = vunpack.c.h.b16 %v196
    %v542 = vunpack.c.l.b16 %v197
    %v543 = vunpack.c.h.b16 %v197
    %v544 = vunpack.c.l.b16 %v198
    %v545 = vunpack.c.h.b16 %v198
    %v546 = vunpack.c.l.b16 %v199
    %v547 = vunpack.c.h.b16 %v199
    %v548 = vunpack.c.l.b16 %v200
    %v549 = vunpack.c.h.b16 %v200
    %v550 = vunpack.c.l.b16 %v201
    %v551 = vunpack.c.h.b16 %v201
    %v552 = vunpack.c.l.b16 %v202
    %v553 = vunpack.c.h.b16 %v202
    %v554 = vunpack.c.l.b16 %v203
    %v555 = vunpack.c.h.b16 %v203
    %v556 = vunpack.c.l.b16 %v204
    %v557 = vunpack.c.h.b16 %v204
    %v558 = vunpack.c.l.b16 %v205
    %v559 = vunpack.c.h.b16 %v205
    %v560 = vunpack.c.l.b16 %v206
    %v561 = vunpack.c.h.b16 %v206
    %v562 = vunpack.c.l.b16 %v207
    %v563 = vunpack.c.h.b16 %v207
    %v564 = vunpack.c.l.b16 %v208
    %v565 = vunpack.c.h.b16 %v208
    %v566 = vunpack.c.l.b16 %v209
    %v567 = vunpack.c.h.b16 %v209
    %v568 = vunpack.c.l.b16 %v210
    %v569 = vunpack.c.h.b16 %v210
    %v570 = vunpack.c.l.b16 %v211
    %v571 = vunpack.c.h.b16 %v211
    %v572 = vunpack.c.l.b16 %v212
    %v573 = vunpack.c.h.b16 %v212
    %v574 = vunpack.c.l.b16 %v213
    %v575 = vunpack.c.h.b16 %v213
    %v576 = vunpack.c.l.b16 %v214
    %v577 = vunpack.c.h.b16 %v214
    %v578 = vunpack.c.l.b16 %v215
    %v579 = vunpack.c.h.b16 %v215
    %v580 = vunpack.c.l.b16 %v216
    %v581 = vunpack.c.h.b16 %v216
    %v582 = vunpack.c.l.b16 %v217
    %v583 = vunpack.c.h.b16 %v217
    %v584 = vunpack.c.l.b16 %v218
    %v585 = vunpack.c.h.b16 %v218
    %v586 = vunpack.c.l.b16 %v219
    %v587 = vunpack.c.h.b16 %v219
    %v588 = vunpack.c.l.b16 %v220
    %v589 = vunpack.c.h.b16 %v220
    %v590 = vunpack.c.l.b16 %v221
    %v591 = vunpack.c.h.b16 %v221
    %v592 = vunpack.c.l.b16 %v222
    %v593 = vunpack.c.h.b16 %v222
    %v594 = vunpack.c.l.b16 %v223
    %v595 = vunpack.c.h.b16 %v223
    %v596 = vunpack.c.l.b16 %v224
    %v597 = vunpack.c.h.b16 %v224
    %v598 = vunpack.c.l.b16 %v225
    %v599 = vunpack.c.h.b16 %v225
    %v600 = vunpack.c.l.b16 %v226
    %v601 = vunpack.c.h.b16 %v226
    %v602 = vunpack.c.l.b16 %v227
    %v603 = vunpack.c.h.b16 %v227
    %v604 = vunpack.c.l.b16 %v228
    %v605 = vunpack.c.h.b16 %v228
    %v606 = vunpack.c.l.b16 %v229
    %v607 = vunpack.c.h.b16 %v229
    %v608 = vunpack.c.l.b16 %v230
    %v609 = vunpack.c.h.b16 %v230
    %v610 = vunpack.c.l.b16 %v231
    %v611 = vunpack.c.h.b16 %v231
    %v612 = vunpack.c.l.b16 %v232
    %v613 = vunpack.c.h.b16 %v232
    %v614 = vunpack.c.l.b16 %v233
    %v615 = vunpack.c.h.b16 %v233
    %v616 = vunpack.c.l.b16 %v234
    %v617 = vunpack.c.h.b16 %v234
    %v618 = vunpack.c.l.b16 %v235
    %v619 = vunpack.c.h.b16 %v235
    %v620 = vunpack.c.l.b16 %v236
    %v621 = vunpack.c.h.b16 %v236
    %v622 = vunpack.c.l.b16 %v237
    %v623 = vunpack.c.h.b16 %v237
    %v624 = vunpack.c.l.b16 %v238
    %v625 = vunpack.c.h.b16 %v238
    %v626 = vunpack.c.l.b16 %v239
    %v627 = vunpack.c.h.b16 %v239
    %v628 = vunpack.c.l.b16 %v240
    %v629 = vunpack.c.h.b16 %v240
    %v630 = vunpack.c.l.b16 %v241
    %v631 = vunpack.c.h.b16 %v241
    %v632 = vunpack.c.l.b16 %v242
    %v633 = vunpack.c.h.b16 %v242
    %v634 = vunpack.c.l.b16 %v243
    %v635 = vunpack.c.h.b16 %v243
    %v636 = vunpack.c.l.b16 %v244
    %v637 = vunpack.c.h.b16 %v244
    %v638 = vunpack.c.l.b16 %v245
    %v639 = vunpack.c.h.b16 %v245
    %v640 = vunpack.c.l.b16 %v246
    %v641 = vunpack.c.h.b16 %v246
    %v642 = vunpack.c.l.b16 %v247
    %v643 = vunpack.c.h.b16 %v247
    %v644 = vunpack.c.l.b16 %v248
    %v645 = vunpack.c.h.b16 %v248
    %v646 = vunpack.c.l.b16 %v249
    %v647 = vunpack.c.h.b16 %v249
    %v648 = vunpack.c.l.b16 %v250
    %v649 = vunpack.c.h.b16 %v250
    %v650 = vunpack.c.l.b16 %v251
    %v651 = vunpack.c.h.b16 %v251
    %v652 = vunpack.c.l.b16 %v252
    %v653 = vunpack.c.h.b16 %v252
    %v654 = vunpack.c.l.b16 %v253
    %v655 = vunpack.c.h.b16 %v253
    %v656 = vunpack.c.l.b16 %v254
    %v657 = vunpack.c.h.b16 %v254
    %v658 = vunpack.c.l.b16 %v255
    %v659 = vunpack.c.h.b16 %v255
    %v660 = vunpack.c.l.b16 %v256
    %v661 = vunpack.c.h.b16 %v256
    %v662 = vunpack.c.l.b16 %v257
    %v663 = vunpack.c.h.b16 %v257
    %v664 = vunpack.c.l.b16 %v258
    %v665 = vunpack.c.h.b16 %v258
    %v666 = vunpack.c.l.b16 %v259
    %v667 = vunpack.c.h.b16 %v259
    %v668 = vunpack.c.l.b16 %v260
    %v669 = vunpack.c.h.b16 %v260
    %v670 = vunpack.c.l.b16 %v261
    %v671 = vunpack.c.h.b16 %v261
    %v672 = vunpack.c.l.b16 %v262
    %v673 = vunpack.c.h.b16 %v262
    %v674 = vunpack.c.l.b16 %v263
    %v675 = vunpack.c.h.b16 %v263
    %v676 = vunpack.c.l.b16 %v264
    %v677 = vunpack.c.h.b16 %v264
    %v678 = vunpack.c.l.b16 %v265
    %v679 = vunpack.c.h.b16 %v265
    %v680 = vunpack.c.l.b16 %v266
    %v681 = vunpack.c.h.b16 %v266
    %v682 = vunpack.c.l.b16 %v267
    %v683 = vunpack.c.h.b16 %v267
    %v684 = vunpack.c.l.b16 %v268
    %v685 = vunpack.c.h.b16 %v268
    %v686 = vunpack.c.l.b16 %v269
    %v687 = vunpack.c.h.b16 %v269
    %v688 = vunpack.c.l.b16 %v270
    %v689 = vunpack.c.h.b16 %v270
    %v690 = vunpack.c.l.b16 %v271
    %v691 = vunpack.c.h.b16 %v271
    %v692 = vunpack.c.l.b16 %v272
    %v693 = vunpack.c.h.b16 %v272
    %v694 = vunpack.c.l.b16 %v273
    %v695 = vunpack.c.h.b16 %v273
    %v696 = vunpack.c.l.b16 %v274
    %v697 = vunpack.c.h.b16 %v274
    %v698 = vunpack.c.l.b16 %v275
    %v699 = vunpack.c.h.b16 %v275
    %v700 = vunpack.c.l.b16 %v276
    %v701 = vunpack.c.h.b16 %v276
    %v702 = vunpack.c.l.b16 %v277
    %v703 = vunpack.c.h.b16 %v277
    %v704 = vpack.c.b16 %v452, %v448
    %v705 = vpack.c.b16 %v453, %v449
    %v706 = vpack.c.b16 %v454, %v450
    %v707 = vpack.c.b16 %v455, %v451
    %v708 = vpack.c.b16 %v460, %v456
    %v709 = vpack.c.b16 %v461, %v457
    %v710 = vpack.c.b16 %v462, %v458
    %v711 = vpack.c.b16 %v463, %v459
    %v712 = vpack.c.b16 %v468, %v464
    %v713 = vpack.c.b16 %v469, %v465
    %v714 = vpack.c.b16 %v470, %v466
    %v715 = vpack.c.b16 %v471, %v467
    %v716 = vpack.c.b16 %v476, %v472
    %v717 = vpack.c.b16 %v477, %v473
    %v718 = vpack.c.b16 %v478, %v474
    %v719 = vpack.c.b16 %v479, %v475
    %v720 = vpack.c.b16 %v484, %v480
    %v721 = vpack.c.b16 %v485, %v481
    %v722 = vpack.c.b16 %v486, %v482
    %v723 = vpack.c.b16 %v487, %v483
    %v724 = vpack.c.b16 %v492, %v488
    %v725 = vpack.c.b16 %v493, %v489
    %v726 = vpack.c.b16 %v494, %v490
    %v727 = vpack.c.b16 %v495, %v491
    %v728 = vpack.c.b16 %v500, %v496
    %v729 = vpack.c.b16 %v501, %v497
    %v730 = vpack.c.b16 %v502, %v498
    %v731 = vpack.c.b16 %v503, %v499
    %v732 = vpack.c.b16 %v508, %v504
    %v733 = vpack.c.b16 %v509, %v505
    %v734 = vpack.c.b16 %v510, %v506
    %v735 = vpack.c.b16 %v511, %v507
    %v736 = vpack.c.b16 %v516, %v512
    %v737 = vpack.c.b16 %v517, %v513
    %v738 = vpack.c.b16 %v518, %v514
    %v739 = vpack.c.b16 %v519, %v515
    %v740 = vpack.c.b16 %v524, %v520
    %v741 = vpack.c.b16 %v525, %v521
    %v742 = vpack.c.b16 %v526, %v522
    %v743 = vpack.c.b16 %v527, %v523
    %v744 = vpack.c.b16 %v532, %v528
    %v745 = vpack.c.b16 %v533, %v529
    %v746 = vpack.c.b16 %v534, %v530
    %v747 = vpack.c.b16 %v535, %v531
    %v748 = vpack.c.b16 %v540, %v536
    %v749 = vpack.c.b16 %v541, %v537
    %v750 = vpack.c.b16 %v542, %v538
    %v751 = vpack.c.b16 %v543, %v539
    %v752 = vpack.c.b16 %v548, %v544
    %v753 = vpack.c.b16 %v549, %v545
    %v754 = vpack.c.b16 %v550, %v546
    %v755 = vpack.c.b16 %v551, %v547
    %v756 = vpack.c.b16 %v556, %v552
    %v757 = vpack.c.b16 %v557, %v553
    %v758 = vpack.c.b16 %v558, %v554
    %v759 = vpack.c.b16 %v559, %v555
    %v760 = vpack.c.b16 %v564, %v560
    %v761 = vpack.c.b16 %v565, %v561
    %v762 = vpack.c.b16 %v566, %v562
    %v763 = vpack.c.b16 %v567, %v563
    %v764 = vpack.c.b16 %v572, %v568
    %v765 = vpack.c.b16 %v573, %v569
    %v766 = vpack.c.b16 %v574, %v570
    %v767 = vpack.c.b16 %v575, %v571
    %v768 = vpack.c.b16 %v580, %v576
    %v769 = vpack.c.b16 %v581, %v577
    %v770 = vpack.c.b16 %v582, %v578
    %v771 = vpack.c.b16 %v583, %v579
    %v772 = vpack.c.b16 %v588, %v584
    %v773 = vpack.c.b16 %v589, %v585
    %v774 = vpack.c.b16 %v590, %v586
    %v775 = vpack.c.b16 %v591, %v587
    %v776 = vpack.c.b16 %v596, %v592
    %v777 = vpack.c.b16 %v597, %v593
    %v778 = vpack.c.b16 %v598, %v594
    %v779 = vpack.c.b16 %v599, %v595
    %v780 = vpack.c.b16 %v604, %v600
    %v781 = vpack.c.b16 %v605, %v601
    %v782 = vpack.c.b16 %v606, %v602
    %v783 = vpack.c.b16 %v607, %v603
    %v784 = vpack.c.b16 %v612, %v608
    %v785 = vpack.c.b16 %v613, %v609
    %v786 = vpack.c.b16 %v614, %v610
    %v787 = vpack.c.b16 %v615, %v611
    %v788 = vpack.c.b16 %v620, %v616
    %v789 = vpack.c.b16 %v621, %v617
    %v790 = vpack.c.b16 %v622, %v618
    %v791 = vpack.c.b16 %v623, %v619
    %v792 = vpack.c.b16 %v628, %v624
    %v793 = vpack.c.b16 %v629, %v625
    %v794 = vpack.c.b16 %v630, %v626
    %v795 = vpack.c.b16 %v631, %v627
    %v796 = vpack.c.b16 %v636, %v632
    %v797 = vpack.c.b16 %v637, %v633
    %v798 = vpack.c.b16 %v638, %v634
    %v799 = vpack.c.b16 %v639, %v635
    %v800 = vpack.c.b16 %v644, %v640
    %v801 = vpack.c.b16 %v645, %v641
    %v802 = vpack.c.b16 %v646, %v642
    %v803 = vpack.c.b16 %v647, %v643
    %v804 = vpack.c.b16 %v652, %v648
    %v805 = vpack.c.b16 %v653, %v649
    %v806 = vpack.c.b16 %v654, %v650
    %v807 = vpack.c.b16 %v655, %v651
    %v808 = vpack.c.b16 %v660, %v656
    %v809 = vpack.c.b16 %v661, %v657
    %v810 = vpack.c.b16 %v662, %v658
    %v811 = vpack.c.b16 %v663, %v659
    %v812 = vpack.c.b16 %v668, %v664
    %v813 = vpack.c.b16 %v669, %v665
    %v814 = vpack.c.b16 %v670, %v666
    %v815 = vpack.c.b16 %v671, %v667
    %v816 = vpack.c.b16 %v676, %v672
    %v817 = vpack.c.b16 %v677, %v673
    %v818 = vpack.c.b16 %v678, %v674
    %v819 = vpack.c.b16 %v679, %v675
    %v820 = vpack.c.b16 %v684, %v680
    %v821 = vpack.c.b16 %v685, %v681
    %v822 = vpack.c.b16 %v686, %v682
    %v823 = vpack.c.b16 %v687, %v683
    %v824 = vpack.c.b16 %v692, %v688
    %v825 = vpack.c.b16 %v693, %v689
    %v826 = vpack.c.b16 %v694, %v690
    %v827 = vpack.c.b16 %v695, %v691
    %v828 = vpack.c.b16 %v700, %v696
    %v829 = vpack.c.b16 %v701, %v697
    %v830 = vpack.c.b16 %v702, %v698
    %v831 = vpack.c.b16 %v703, %v699
    %960 = vmatprep.subr.bf16.mxu0 %v733
    %961 = vmatpush1.bf16.msra.mxu0 %v732
    %962 = vmatprep.subr.bf16.mxu0 %v729
    %963 = vmatpush1.bf16.msra.mxu0 %v728
    %964 = vmatprep.subr.bf16.mxu0 %v725
    %965 = vmatpush1.bf16.msra.mxu0 %v724
    %966 = vmatprep.subr.bf16.mxu0 %v721
    %967 = vmatpush1.bf16.msra.mxu0 %v720
    %968 = vmatprep.subr.bf16.mxu0 %v717
    %969 = vmatpush1.bf16.msra.mxu0 %v716
    %970 = vmatprep.subr.bf16.mxu0 %v713
    %971 = vmatpush1.bf16.msra.mxu0 %v712
    %972 = vmatprep.subr.bf16.mxu0 %v709
    %973 = vmatpush1.bf16.msra.mxu0 %v708
    %974 = vmatprep.subr.bf16.mxu0 %v705
    %975 = vmatpush1.bf16.msra.mxu0 %v704
    %976 = vmatprep.subr.bf16.mxu0 %v765
    %977 = vmatpush2.bf16.msra.mxu0 %v764
    %978 = vmatprep.subr.bf16.mxu0 %v761
    %979 = vmatpush2.bf16.msra.mxu0 %v760
    %980 = vmatprep.subr.bf16.mxu0 %v757
    %981 = vmatpush2.bf16.msra.mxu0 %v756
    %982 = vmatprep.subr.bf16.mxu0 %v753
    %983 = vmatpush2.bf16.msra.mxu0 %v752
    %984 = vmatprep.subr.bf16.mxu0 %v749
    %985 = vmatpush2.bf16.msra.mxu0 %v748
    %986 = vmatprep.subr.bf16.mxu0 %v745
    %987 = vmatpush2.bf16.msra.mxu0 %v744
    %988 = vmatprep.subr.bf16.mxu0 %v741
    %989 = vmatpush2.bf16.msra.mxu0 %v740
    %990 = vmatprep.subr.bf16.mxu0 %v737
    %991 = vmatpush2.bf16.msra.mxu0 %v736
    %992 = vmatprep.mubr.bf16.mxu0 %v313
    %993 = vmatmul.mubr.bf16.gmra.mxu0 %v312
    %v994 = vpop.f32.mrf.mxu0
    %v995 = vadd.f32 %v283, %v994
    %v996 = vpop.f32.mrf.mxu0
    %v997 = vadd.f32 %v287, %v996
    %v998 = vpop.f32.mrf.mxu0
    %v999 = vadd.f32 %v283, %v998
    %v1000 = vpop.f32.mrf.mxu0
    %v1001 = vadd.f32 %v287, %v1000
    %1002 = vdwg.mxu0
    %1003 = vmatprep.subr.bf16.mxu0 %v797
    %1004 = vmatpush1.bf16.msra.mxu0 %v796
    %1005 = vmatprep.subr.bf16.mxu0 %v793
    %1006 = vmatpush1.bf16.msra.mxu0 %v792
    %1007 = vmatprep.subr.bf16.mxu0 %v789
    %1008 = vmatpush1.bf16.msra.mxu0 %v788
    %1009 = vmatprep.subr.bf16.mxu0 %v785
    %1010 = vmatpush1.bf16.msra.mxu0 %v784
    %1011 = vmatprep.subr.bf16.mxu0 %v781
    %1012 = vmatpush1.bf16.msra.mxu0 %v780
    %1013 = vmatprep.subr.bf16.mxu0 %v777
    %1014 = vmatpush1.bf16.msra.mxu0 %v776
    %1015 = vmatprep.subr.bf16.mxu0 %v773
    %1016 = vmatpush1.bf16.msra.mxu0 %v772
    %1017 = vmatprep.subr.bf16.mxu0 %v769
    %1018 = vmatpush1.bf16.msra.mxu0 %v768
    %1019 = vmatprep.subr.bf16.mxu0 %v829
    %1020 = vmatpush2.bf16.msra.mxu0 %v828
    %1021 = vmatprep.subr.bf16.mxu0 %v825
    %1022 = vmatpush2.bf16.msra.mxu0 %v824
    %1023 = vmatprep.subr.bf16.mxu0 %v821
    %1024 = vmatpush2.bf16.msra.mxu0 %v820
    %1025 = vmatprep.subr.bf16.mxu0 %v817
    %1026 = vmatpush2.bf16.msra.mxu0 %v816
    %1027 = vmatprep.subr.bf16.mxu0 %v813
    %1028 = vmatpush2.bf16.msra.mxu0 %v812
    %1029 = vmatprep.subr.bf16.mxu0 %v809
    %1030 = vmatpush2.bf16.msra.mxu0 %v808
    %1031 = vmatprep.subr.bf16.mxu0 %v805
    %1032 = vmatpush2.bf16.msra.mxu0 %v804
    %1033 = vmatprep.subr.bf16.mxu0 %v801
    %1034 = vmatpush2.bf16.msra.mxu0 %v800
    %1035 = vmatprep.mubr.bf16.mxu0 %v315
    %1036 = vmatmul.mubr.bf16.gmra.mxu0 %v314
    %v1037 = vpop.f32.mrf.mxu0
    %v1038 = vadd.f32 %v995, %v1037
    %v1039 = vpop.f32.mrf.mxu0
    %v1040 = vadd.f32 %v997, %v1039
    %v1041 = vpop.f32.mrf.mxu0
    %v1042 = vadd.f32 %v999, %v1041
    %v1043 = vpop.f32.mrf.mxu0
    %v1044 = vadd.f32 %v1001, %v1043
    %1045 = vdwg.mxu0
    %1046 = vmatprep.subr.bf16.mxu0 %v735
    %1047 = vmatpush1.bf16.msra.mxu0 %v734
    %1048 = vmatprep.subr.bf16.mxu0 %v731
    %1049 = vmatpush1.bf16.msra.mxu0 %v730
    %1050 = vmatprep.subr.bf16.mxu0 %v727
    %1051 = vmatpush1.bf16.msra.mxu0 %v726
    %1052 = vmatprep.subr.bf16.mxu0 %v723
    %1053 = vmatpush1.bf16.msra.mxu0 %v722
    %1054 = vmatprep.subr.bf16.mxu0 %v719
    %1055 = vmatpush1.bf16.msra.mxu0 %v718
    %1056 = vmatprep.subr.bf16.mxu0 %v715
    %1057 = vmatpush1.bf16.msra.mxu0 %v714
    %1058 = vmatprep.subr.bf16.mxu0 %v711
    %1059 = vmatpush1.bf16.msra.mxu0 %v710
    %1060 = vmatprep.subr.bf16.mxu0 %v707
    %1061 = vmatpush1.bf16.msra.mxu0 %v706
    %1062 = vmatprep.subr.bf16.mxu0 %v767
    %1063 = vmatpush2.bf16.msra.mxu0 %v766
    %1064 = vmatprep.subr.bf16.mxu0 %v763
    %1065 = vmatpush2.bf16.msra.mxu0 %v762
    %1066 = vmatprep.subr.bf16.mxu0 %v759
    %1067 = vmatpush2.bf16.msra.mxu0 %v758
    %1068 = vmatprep.subr.bf16.mxu0 %v755
    %1069 = vmatpush2.bf16.msra.mxu0 %v754
    %1070 = vmatprep.subr.bf16.mxu0 %v751
    %1071 = vmatpush2.bf16.msra.mxu0 %v750
    %1072 = vmatprep.subr.bf16.mxu0 %v747
    %1073 = vmatpush2.bf16.msra.mxu0 %v746
    %1074 = vmatprep.subr.bf16.mxu0 %v743
    %1075 = vmatpush2.bf16.msra.mxu0 %v742
    %1076 = vmatprep.subr.bf16.mxu0 %v739
    %1077 = vmatpush2.bf16.msra.mxu0 %v738
    %1078 = vmatprep.mubr.bf16.mxu0 %v313
    %1079 = vmatmul.mubr.bf16.gmra.mxu0 %v312
    %v1080 = vpop.f32.mrf.mxu0
    %v1081 = vadd.f32 %v291, %v1080
    %v1082 = vpop.f32.mrf.mxu0
    %v1083 = vadd.f32 %v295, %v1082
    %v1084 = vpop.f32.mrf.mxu0
    %v1085 = vadd.f32 %v291, %v1084
    %v1086 = vpop.f32.mrf.mxu0
    %v1087 = vadd.f32 %v295, %v1086
    %1088 = vdwg.mxu0
    %1089 = vmatprep.subr.bf16.mxu0 %v799
    %1090 = vmatpush1.bf16.msra.mxu0 %v798
    %1091 = vmatprep.subr.bf16.mxu0 %v795
    %1092 = vmatpush1.bf16.msra.mxu0 %v794
    %1093 = vmatprep.subr.bf16.mxu0 %v791
    %1094 = vmatpush1.bf16.msra.mxu0 %v790
    %1095 = vmatprep.subr.bf16.mxu0 %v787
    %1096 = vmatpush1.bf16.msra.mxu0 %v786
    %1097 = vmatprep.subr.bf16.mxu0 %v783
    %1098 = vmatpush1.bf16.msra.mxu0 %v782
    %1099 = vmatprep.subr.bf16.mxu0 %v779
    %1100 = vmatpush1.bf16.msra.mxu0 %v778
    %1101 = vmatprep.subr.bf16.mxu0 %v775
    %1102 = vmatpush1.bf16.msra.mxu0 %v774
    %1103 = vmatprep.subr.bf16.mxu0 %v771
    %1104 = vmatpush1.bf16.msra.mxu0 %v770
    %1105 = vmatprep.subr.bf16.mxu0 %v831
    %1106 = vmatpush2.bf16.msra.mxu0 %v830
    %1107 = vmatprep.subr.bf16.mxu0 %v827
    %1108 = vmatpush2.bf16.msra.mxu0 %v826
    %1109 = vmatprep.subr.bf16.mxu0 %v823
    %1110 = vmatpush2.bf16.msra.mxu0 %v822
    %1111 = vmatprep.subr.bf16.mxu0 %v819
    %1112 = vmatpush2.bf16.msra.mxu0 %v818
    %1113 = vmatprep.subr.bf16.mxu0 %v815
    %1114 = vmatpush2.bf16.msra.mxu0 %v814
    %1115 = vmatprep.subr.bf16.mxu0 %v811
    %1116 = vmatpush2.bf16.msra.mxu0 %v810
    %1117 = vmatprep.subr.bf16.mxu0 %v807
    %1118 = vmatpush2.bf16.msra.mxu0 %v806
    %1119 = vmatprep.subr.bf16.mxu0 %v803
    %1120 = vmatpush2.bf16.msra.mxu0 %v802
    %1121 = vmatprep.mubr.bf16.mxu0 %v315
    %1122 = vmatmul.mubr.bf16.gmra.mxu0 %v314
    %v1123 = vpop.f32.mrf.mxu0
    %v1124 = vadd.f32 %v1081, %v1123
    %v1125 = vpop.f32.mrf.mxu0
    %v1126 = vadd.f32 %v1083, %v1125
    %v1127 = vpop.f32.mrf.mxu0
    %v1128 = vadd.f32 %v1085, %v1127
    %v1129 = vpop.f32.mrf.mxu0
    %v1130 = vadd.f32 %v1087, %v1129
    %1131 = vdwg.mxu0
    %v1132 = vmax.f32 %v1038, 0.0
    %v1133 = vmax.f32 %v1040, 0.0
    %v1134 = vmax.f32 %v1124, 0.0
    %v1135 = vmax.f32 %v1126, 0.0
    %v1136 = vmax.f32 %v1042, 0.0
    %v1137 = vmax.f32 %v1044, 0.0
    %v1138 = vmax.f32 %v1128, 0.0
    %v1139 = vmax.f32 %v1130, 0.0
    %v1140 = vld [vmem:[%s6] sm:$0xf]
    %v1142 = vlaneseq
    %v1143 = vshrl.u32 %v1142, 7
    %v1144 = vsub.s32 0, %v1143
    %v1145 = vrot.slane %v1140, %v1144
    %v1146 = vlaneseq
    %v1147 = vshrl.u32 %v1146, 7
    %v1148 = vsub.s32 1, %v1147
    %v1149 = vrot.slane %v1140, %v1148
    %v1150 = vlaneseq
    %v1151 = vshrl.u32 %v1150, 7
    %v1152 = vsub.s32 2, %v1151
    %v1153 = vrot.slane %v1140, %v1152
    %v1154 = vlaneseq
    %v1155 = vshrl.u32 %v1154, 7
    %v1156 = vsub.s32 3, %v1155
    %v1157 = vrot.slane %v1140, %v1156
    %v1162 = vmul.f32 %v1132, %v1145
    %v1163 = vmul.f32 %v1133, %v1149
    %v1164 = vmul.f32 %v1134, %v1153
    %v1165 = vmul.f32 %v1135, %v1157
    %v1166 = vmul.f32 %v1136, %v1145
    %v1167 = vmul.f32 %v1137, %v1149
    %v1168 = vmul.f32 %v1138, %v1153
    %v1169 = vmul.f32 %v1139, %v1157
    %v1170 = vadd.f32 %v1162, %v1163
    %v1171 = vadd.f32 %v1170, %v1164
    %v1172 = vadd.f32 %v1171, %v1165
    %1173 = vadd.xlane.f32.xlu0 %v1172
    %v1174 = vpop.xlane.xlu0 %1173
    %v1175 = vadd.f32 %v1166, %v1167
    %v1176 = vadd.f32 %v1175, %v1168
    %v1177 = vadd.f32 %v1176, %v1169
    %1178 = vadd.xlane.f32.xlu0 %v1177
    %v1179 = vpop.xlane.xlu0 %1178
    %s1180 = sld [smem:[#allocation3]]
    %v1181 = vstv %s1180
    %v1182 = vadd.f32 %v1174, %v1181
    %v1183 = vadd.f32 %v1179, %v1181
    %v1184 = vxor.u32 %v1182, 2147483648
    %v1185 = vxor.u32 %v1183, 2147483648
    %v1186 = vmul.f32 %v1184, 1.442695
    %v1187 = vpow.pop %v1186
    %v1188 = vmul.f32 %v1185, 1.442695
    %v1189 = vpow.pop %v1188
    %v1190 = vadd.f32 %v1187, 1.0
    %v1191 = vadd.f32 %v1189, 1.0
    %v1192 = vrcp.pop %v1190
    %v1193 = vmul.f32 1.0, %v1192
    %v1194 = vrcp.pop %v1191
    %v1195 = vmul.f32 1.0, %v1194
    %vm1196 = vcmask 7168
    %1197 = vst.msk [vmem:[#allocation12] sm:$0xff] %vm1196, %v1193
    %1198 = vst.msk [vmem:[#allocation12 + $0x8] sm:$0xff] %vm1196, %v1195
    // Predicated region
    $region54: #{tpu_custom_call.1} parent=1 // pred_check
      _
    $region55: #{tpu_custom_call.1} parent=1 // pred_check_branch
      %1200 = sbr.rel (0) target = $region57
    $region56: #{tpu_custom_call.1} parent=1 // pred_region
      // Predicated region
      $region58: #{tpu_custom_call.1} parent=56 // pred_check
        _
      $region59: #{tpu_custom_call.1} parent=56 // pred_check_branch
        %1202 = sbr.rel (0) target = $region61
      $region60: #{tpu_custom_call.1} parent=56 // pred_region
        // Predicated region
        $region62: #{tpu_custom_call.1} parent=60 // pred_check
          _
        $region63: #{tpu_custom_call.1} parent=60 // pred_check_branch
          %1204 = sbr.rel (0) target = $region65
        $region64: #{tpu_custom_call.1} parent=60 // pred_region
          // Predicated region
          $region77: #{tpu_custom_call.1} parent=64 // pred_check
            _
          $region78: #{tpu_custom_call.1} parent=64 // pred_check_branch
            %1220 = sbr.rel (0) target = $region80
          $region79: #{tpu_custom_call.1} parent=64 // pred_region
            loop: start=0, step=1, limit=1
            $region81: #{tpu_custom_call.1} parent=79 // loop_pre_header
              _
            $region82: #{tpu_custom_call.1} parent=79 // loop_header
              %s1222 = sphi 0, %s1226
              %p1223 = scmp.ge.s32.totalorder %s1222, 1
              %s1227 = sphi [#allocation12], [#allocation12]
              %s1228 = sphi %s8, %s8
            $region83: #{tpu_custom_call.1} parent=79 // loop_header_branch
              %1225 = sbr.rel (%p1223) target = $region87
            $region84: #{tpu_custom_call.1} parent=79 // loop_body
              %v1229 = vld [vmem:[%s1227] sm:$0xff]
              %1230 = vst [vmem:[%s1228] sm:$0xff] %v1229
            $region85: #{tpu_custom_call.1} parent=79 // loop_footer
              %s1226 = sadd.s32 1, %s1222
            $region86: #{tpu_custom_call.1} parent=79 // loop_footer_branch
              %1221 = sbr.rel target = $region82
            $region87: #{tpu_custom_call.1} parent=79 // loop_exit
              _
          $region80: #{tpu_custom_call.1} parent=64 // pred_fallthru
            _
          // Predicated region
          $region88: #{tpu_custom_call.1} parent=64 // pred_check
            _
          $region89: #{tpu_custom_call.1} parent=64 // pred_check_branch
            %1232 = sbr.rel target = $region91
          $region90: #{tpu_custom_call.1} parent=64 // pred_region
            _
          $region91: #{tpu_custom_call.1} parent=64 // pred_fallthru
            _
        $region65: #{tpu_custom_call.1} parent=60 // pred_fallthru
          _
        // Predicated region
        $region66: #{tpu_custom_call.1} parent=60 // pred_check
          _
        $region67: #{tpu_custom_call.1} parent=60 // pred_check_branch
          %1206 = sbr.rel target = $region69
        $region68: #{tpu_custom_call.1} parent=60 // pred_region
          %s1208 = ssub.s32 256, 1
          loop: start=0, step=1, limit=1
          $region70: #{tpu_custom_call.1} parent=68 // loop_pre_header
            _
          $region71: #{tpu_custom_call.1} parent=68 // loop_header
            %s1210 = sphi 0, %s1214
            %p1211 = scmp.ge.s32.totalorder %s1210, 1
            %s1215 = sphi [#allocation12], [#allocation12]
            %s1216 = sphi %s8, %s8
          $region72: #{tpu_custom_call.1} parent=68 // loop_header_branch
            %1213 = sbr.rel (%p1211) target = $region76
          $region73: #{tpu_custom_call.1} parent=68 // loop_body
            %v1217 = vld [vmem:[%s1215] sm:%s1208]
            %1218 = vst [vmem:[%s1216] sm:%s1208] %v1217
          $region74: #{tpu_custom_call.1} parent=68 // loop_footer
            %s1214 = sadd.s32 1, %s1210
          $region75: #{tpu_custom_call.1} parent=68 // loop_footer_branch
            %1209 = sbr.rel target = $region71
          $region76: #{tpu_custom_call.1} parent=68 // loop_exit
            _
        $region69: #{tpu_custom_call.1} parent=60 // pred_fallthru
          _
      $region61: #{tpu_custom_call.1} parent=56 // pred_fallthru
        _
      %1233 = vnop
    $region57: #{tpu_custom_call.1} parent=1 // pred_fallthru
      _
    // Predicated region
    $region92: #{tpu_custom_call.1} parent=1 // pred_check
      _
    $region93: #{tpu_custom_call.1} parent=1 // pred_check_branch
      %1235 = sbr.rel (0) target = $region95
    $region94: #{tpu_custom_call.1} parent=1 // pred_region
      _
    $region95: #{tpu_custom_call.1} parent=1 // pred_fallthru
      _
    %1236 = vsyncpa [#allocation5], 1
    %1237 = vsyncpa [#allocation7], 1
    %1238 = vsyncpa [#allocation10], 1

</llo_original>
